<compile_context>
chip_gen: v7x
topology: tpu7x:2x2x1
jax: 0.10.0
libtpu: 0.0.40
codegen_flags: <defaults>
</compile_context>

<pallas_src>
import functools

import jax
import jax.numpy as jnp
from jax import lax
from jax.experimental import pallas as pl
from jax.experimental.pallas import tpu as pltpu


def _round_up(v, mult):
    return ((v + mult - 1) // mult) * mult


def _amsoftmax_kernel(x_ref, w_ref, invnw_ref, lab_ref, out_ref,
                      s_invnx_sc, tgt_sc, sum_sc,
                      *, s, m, eps, num_classes, has_class_pad):
    j = pl.program_id(1)  # class-tile (reduction) index
    tc = w_ref.shape[1]

    @pl.when(j == 0)
    def _init():
        xf = x_ref[...].astype(jnp.float32)
        # F.normalize: v / max(||v||, 1e-12) == v * rsqrt(max(||v||^2, 1e-24)).
        # The scale s is folded in here so the per-step logits tile is already s*cos.
        s_invnx_sc[...] = s * lax.rsqrt(
            jnp.maximum(jnp.sum(xf * xf, axis=1, keepdims=True), 1e-24))
        tgt_sc[...] = jnp.zeros_like(tgt_sc)
        sum_sc[...] = jnp.zeros_like(sum_sc)

    # Plain (tn, K) x (K, tc) MXU contraction; W was pre-transposed + pre-cast once
    # in the wrapper, so no in-kernel transpose of the re-streamed W tile.
    raw = jnp.dot(x_ref[...], w_ref[...], preferred_element_type=jnp.float32)
    swf = raw * s_invnx_sc[...] * invnw_ref[...]                 # s * cos, (tn, tc)

    # Loop-invariant local column ids vs. per-row local label (a (tn, 1) scalar op).
    col_local = lax.broadcasted_iota(jnp.int32, swf.shape, 1)
    local_label = lab_ref[...] - j * tc                          # (tn, 1) int32
    is_target = col_local == local_label

    # Target s*cos: each row's label falls into exactly one class tile.
    tgt_sc[...] += jnp.sum(jnp.where(is_target, swf, 0.0), axis=1, keepdims=True)

    # No running max needed: |s*cos| <= s = 30, so exp never overflows f32.
    # Target / padded-class columns get -9000 -> exp underflows to exactly 0.
    mask = is_target
    if has_class_pad:  # static; only emitted when c_pad != num_classes
        mask = jnp.logical_or(mask, col_local >= num_classes - j * tc)
    z = jnp.where(mask, -9000.0, swf)
    sum_sc[...] += jnp.sum(jnp.exp(z), axis=1, keepdims=True)

    @pl.when(j == pl.num_programs(1) - 1)
    def _finalize():
        numerator = tgt_sc[...] - s * m                          # s*(cos_y - m), (tn, 1)
        denominator = jnp.exp(numerator) + sum_sc[...]
        out_ref[...] = numerator - jnp.log(denominator + eps)


def amsoftmax_loss(x, weight, labels, *, s=30.0, m=0.4, eps=1e-7,
                   block_n=None, block_c=1024, compute_dtype=jnp.bfloat16):
    """x: (N, D) float, weight: (C, D) float (nn.Linear layout), labels: (N,) int.

    block_n=None  -> auto: whole batch resident in VMEM when it fits (W streamed
                     exactly once), else 512-row tiles.
    compute_dtype -> MXU operand dtype (bf16 halves the dominant W HBM stream and
                     runs the MXU at native rate); all norm/softmax math stays f32.
    """
    n, d = x.shape
    c, d_w = weight.shape
    assert d == d_w

    itemsize = jnp.dtype(compute_dtype).itemsize
    d_pad = _round_up(d, 128)
    n_al = _round_up(n, 8)

    # ---- batch tile ---------------------------------------------------------
    if block_n is None:
        # x fully resident (single row-tile sweep => W streamed once) if it is only
        # a few MiB; otherwise large 512-row tiles to keep W traffic ~ C*D*N/512.
        # NOTE: on v7x, force >=2 row tiles (pass block_n) if you want both
        # TensorCores busy via the "parallel" batch axis.
        tn = n_al if n_al * d_pad * itemsize <= (8 << 20) else min(512, n_al)
    else:
        tn = min(_round_up(block_n, 8), n_al)

    # ---- class tile (multiple of 128; >=256 preferred for the 256-wide MXU) --
    tc = min(_round_up(block_c, 128), _round_up(c, 128))

    # ---- VMEM working-set budget (v7x-safe: 64 MiB physical, 32 MiB scoped) --
    def _vmem_est(tn_, tc_):
        return (2 * (tn_ + tc_) * d_pad * itemsize   # double-buffered x + W tiles
                + 2 * 8 * tc_ * 4                    # (1, tc) inv_nw blocks
                + 7 * tn_ * 128 * 4)                 # labels/out blocks + 3 scratch cols

    budget = 40 << 20
    while _vmem_est(tn, tc) > budget:
        if tc > 256:
            tc = max(256, _round_up(tc // 2, 256))
        elif tn > 256:
            tn = max(256, _round_up(tn // 2, 8))
        elif tc > 128:
            tc = 128
        elif tn > 8:
            tn = max(8, _round_up(tn // 2, 8))
        else:
            break
    vmem_limit = int(min(48 << 20, max(2 * _vmem_est(tn, tc), 32 << 20)))

    n_pad = _round_up(n, tn)
    c_pad = _round_up(c, tc)

    # ---- wrapper-side prep (each a single fused XLA pass over x / W) ---------
    # Per-class inverse L2 norm: fused sum-of-squares in W's native dtype with f32
    # accumulation (no extra full-precision W materialization), lane-major (1, C).
    sq = jnp.einsum('cd,cd->c', weight, weight,
                    preferred_element_type=jnp.float32)
    inv_nw = lax.rsqrt(jnp.maximum(sq, 1e-24))
    inv_nw = jnp.pad(inv_nw, (0, c_pad - c)).reshape(1, c_pad)

    xp = x
    if (n_pad, d_pad) != (n, d):
        xp = jnp.pad(x, ((0, n_pad - n), (0, d_pad - d)))
    xp = xp.astype(compute_dtype)

    wp = weight
    if (c_pad, d_pad) != (c, d):
        wp = jnp.pad(weight, ((0, c_pad - c), (0, d_pad - d)))
    wt = wp.astype(compute_dtype).T                              # (d_pad, c_pad)

    labels2d = jnp.pad(labels.astype(jnp.int32), (0, n_pad - n)).reshape(n_pad, 1)

    kernel = functools.partial(
        _amsoftmax_kernel, s=float(s), m=float(m), eps=float(eps),
        num_classes=int(c), has_class_pad=bool(c_pad != c))

    grid = (n_pad // tn, c_pad // tc)

    per_row = pl.pallas_call(
        kernel,
        out_shape=jax.ShapeDtypeStruct((n_pad, 1), jnp.float32),
        grid_spec=pltpu.PrefetchScalarGridSpec(
            num_scalar_prefetch=0,
            grid=grid,
            in_specs=[
                pl.BlockSpec((tn, d_pad), lambda i, j: (i, 0)),   # x rows (resident per i)
                # W class tiles, streamed / double-buffered by the pipeline.
                # (If profiling shows exposed W DMA, add pipeline_mode=pl.Buffered(3).)
                pl.BlockSpec((d_pad, tc), lambda i, j: (0, j)),
                pl.BlockSpec((1, tc), lambda i, j: (0, j)),       # 1/||w_c|| (f32)
                pl.BlockSpec((tn, 1), lambda i, j: (i, 0)),       # labels
            ],
            out_specs=pl.BlockSpec((tn, 1), lambda i, j: (i, 0)),
            scratch_shapes=[
                pltpu.VMEM((tn, 1), jnp.float32),   # s / ||x_i||
                pltpu.VMEM((tn, 1), jnp.float32),   # s * target cosine
                pltpu.VMEM((tn, 1), jnp.float32),   # running sum of exp
            ],
        ),
        compiler_params=pltpu.CompilerParams(
            dimension_semantics=("parallel", "arbitrary"),
            vmem_limit_bytes=vmem_limit),
    )(xp, wt, inv_nw, labels2d)

    # Mean over the real (unpadded) rows; negation per the reference.
    return -jnp.mean(per_row[:n, 0])


def _reference_loss(x, weight, labels, *, s=30.0, m=0.4, eps=1e-7):
    # Pure-JAX reference mirroring the PyTorch forward.
    xn = x / jnp.maximum(jnp.linalg.norm(x, axis=1, keepdims=True), 1e-12)
    wn = weight / jnp.maximum(jnp.linalg.norm(weight, axis=1, keepdims=True), 1e-12)
    wf = jnp.matmul(xn, wn.T, precision=lax.Precision.HIGHEST)
    n, c = wf.shape
    numerator = s * (wf[jnp.arange(n), labels] - m)
    mask = labels[:, None] == jnp.arange(c)[None, :]
    excl = jnp.where(mask, -9000.0, s * wf)
    denominator = jnp.exp(numerator) + jnp.sum(jnp.exp(excl), axis=1)
    L = numerator - jnp.log(denominator + eps)
    return -jnp.mean(L)


if __name__ == "__main__":
    # Small shapes consistent with the module: x is (N, in_features),
    # weight is (out_features, in_features), labels in [0, out_features).
    # Sizes chosen to exercise row padding, feature padding and class padding.
    N, IN_FEATURES, OUT_FEATURES = 13, 120, 250

    key = jax.random.PRNGKey(0)
    kx, kw, kl = jax.random.split(key, 3)

    x = jax.random.normal(kx, (N, IN_FEATURES), dtype=jnp.float32)
    weight = jax.random.normal(kw, (OUT_FEATURES, IN_FEATURES),
                               dtype=jnp.float32) * 0.1
    labels = jax.random.randint(kl, (N,), 0, OUT_FEATURES, dtype=jnp.int32)

    ref = _reference_loss(x, weight, labels)

    # 1) f32 path with small explicit tiles: exercises a 2x2 grid plus the
    #    padded-class / padded-row masking; must match the reference tightly.
    loss_f32 = amsoftmax_loss(x, weight, labels, block_n=8, block_c=128,
                              compute_dtype=jnp.float32)
    loss_f32 = jax.block_until_ready(loss_f32)
    assert jnp.allclose(loss_f32, ref, rtol=5e-4, atol=5e-4), (loss_f32, ref)

    # 2) Default fast path: auto (whole batch resident, W streamed once), bf16 MXU
    #    operands — validate with a bf16-appropriate tolerance.
    loss_bf16 = amsoftmax_loss(x, weight, labels)
    loss_bf16 = jax.block_until_ready(loss_bf16)
    assert jnp.allclose(loss_bf16, ref, rtol=2e-2, atol=2e-2), (loss_bf16, ref)

    print("KERNEL_OK")
</pallas_src>

<mosaic_0001>
module attributes {stable_mosaic.version = 11 : i64} {
  func.func @_amsoftmax_kernel(%arg0: i32, %arg1: i32, %arg2: memref<8x128xf32, #tpu.memory_space<vmem>>, %arg3: memref<128x128xf32, #tpu.memory_space<vmem>>, %arg4: memref<1x128xf32, #tpu.memory_space<vmem>>, %arg5: memref<8x1xi32, #tpu.memory_space<vmem>>, %arg6: memref<8x1xf32, #tpu.memory_space<vmem>>, %arg7: memref<8x1xf32, #tpu.memory_space<vmem>>, %arg8: memref<8x1xf32, #tpu.memory_space<vmem>>, %arg9: memref<8x1xf32, #tpu.memory_space<vmem>>) attributes {dimension_semantics = [#tpu.dimension_semantics<parallel>, #tpu.dimension_semantics<arbitrary>], iteration_bounds = array<i64: 2, 2>, scalar_prefetch = 0 : i64, scratch_operands = 3 : i64, tpu.core_type = #tpu.core_type<tc>, window_params = [{transform_indices = @transform_0, window_bounds = array<i64: 8, 128>}, {transform_indices = @transform_1, window_bounds = array<i64: 128, 128>}, {transform_indices = @transform_2, window_bounds = array<i64: 1, 128>}, {transform_indices = @transform_3, window_bounds = array<i64: 8, 1>}, {transform_indices = @transform_4, window_bounds = array<i64: 8, 1>}]} {
    %c0_i32 = arith.constant 0 : i32
    %0 = arith.cmpi eq, %arg1, %c0_i32 : i32
    %1 = arith.extui %0 : i1 to i32
    %c0_i32_0 = arith.constant 0 : i32
    %2 = arith.cmpi ne, %1, %c0_i32_0 : i32
    scf.if %2 {
      %c0_24 = arith.constant 0 : index
      %c0_25 = arith.constant 0 : index
      %42 = vector.load %arg2[%c0_24, %c0_25] : memref<8x128xf32, #tpu.memory_space<vmem>>, vector<8x128xf32>
      %43 = arith.mulf %42, %42 : vector<8x128xf32>
      %cst_26 = arith.constant dense<0.000000e+00> : vector<8xf32>
      %44 = vector.multi_reduction <add>, %43, %cst_26 [1] : vector<8x128xf32> to vector<8xf32>
      %45 = vector.shape_cast %44 : vector<8xf32> to vector<8x1xf32>
      %cst_27 = arith.constant 1.000000e-24 : f32
      %46 = vector.broadcast %cst_27 : f32 to vector<8x1xf32>
      %47 = arith.maximumf %45, %46 : vector<8x1xf32>
      %48 = math.rsqrt %47 : vector<8x1xf32>
      %cst_28 = arith.constant 3.000000e+01 : f32
      %49 = vector.broadcast %cst_28 : f32 to vector<8x1xf32>
      %50 = arith.mulf %49, %48 : vector<8x1xf32>
      %c0_29 = arith.constant 0 : index
      %c0_30 = arith.constant 0 : index
      %51 = vector.load %arg7[%c0_29, %c0_30] : memref<8x1xf32, #tpu.memory_space<vmem>>, vector<8x1xf32>
      tpu.vector_store %arg7[%c0_29, %c0_30], %50 {strides = array<i32>} : memref<8x1xf32, #tpu.memory_space<vmem>>, vector<8x1xf32>,
      %cst_31 = arith.constant 0.000000e+00 : f32
      %52 = vector.broadcast %cst_31 : f32 to vector<8x1xf32>
      %c0_32 = arith.constant 0 : index
      %c0_33 = arith.constant 0 : index
      %53 = vector.load %arg8[%c0_32, %c0_33] : memref<8x1xf32, #tpu.memory_space<vmem>>, vector<8x1xf32>
      tpu.vector_store %arg8[%c0_32, %c0_33], %52 {strides = array<i32>} : memref<8x1xf32, #tpu.memory_space<vmem>>, vector<8x1xf32>,
      %cst_34 = arith.constant 0.000000e+00 : f32
      %54 = vector.broadcast %cst_34 : f32 to vector<8x1xf32>
      %c0_35 = arith.constant 0 : index
      %c0_36 = arith.constant 0 : index
      %55 = vector.load %arg9[%c0_35, %c0_36] : memref<8x1xf32, #tpu.memory_space<vmem>>, vector<8x1xf32>
      tpu.vector_store %arg9[%c0_35, %c0_36], %54 {strides = array<i32>} : memref<8x1xf32, #tpu.memory_space<vmem>>, vector<8x1xf32>,
    } else {
    }
    %c0 = arith.constant 0 : index
    %c0_1 = arith.constant 0 : index
    %3 = vector.load %arg2[%c0, %c0_1] : memref<8x128xf32, #tpu.memory_space<vmem>>, vector<8x128xf32>
    %c0_2 = arith.constant 0 : index
    %c0_3 = arith.constant 0 : index
    %4 = vector.load %arg3[%c0_2, %c0_3] : memref<128x128xf32, #tpu.memory_space<vmem>>, vector<128x128xf32>
    %cst = arith.constant dense<0.000000e+00> : vector<8x128xf32>
    %5 = tpu.matmul %3, %4, %cst {dimension_numbers = #tpu.dot_dimension_numbers<[1], [0], [0], [1], [0, 0, 1, 1], [], []>} : vector<8x128xf32>, vector<128x128xf32>, vector<8x128xf32> -> vector<8x128xf32>
    %c0_4 = arith.constant 0 : index
    %c0_5 = arith.constant 0 : index
    %6 = vector.load %arg7[%c0_4, %c0_5] : memref<8x1xf32, #tpu.memory_space<vmem>>, vector<8x1xf32>
    %7 = vector.broadcast %6 : vector<8x1xf32> to vector<8x128xf32>
    %8 = arith.mulf %5, %7 : vector<8x128xf32>
    %c0_6 = arith.constant 0 : index
    %c0_7 = arith.constant 0 : index
    %9 = vector.load %arg4[%c0_6, %c0_7] : memref<1x128xf32, #tpu.memory_space<vmem>>, vector<1x128xf32>
    %10 = vector.broadcast %9 : vector<1x128xf32> to vector<8x128xf32>
    %11 = arith.mulf %8, %10 : vector<8x128xf32>
    %12 = tpu.iota {dimensions = array<i32: 1>} : vector<8x128xi32>
    %c0_8 = arith.constant 0 : index
    %c0_9 = arith.constant 0 : index
    %13 = vector.load %arg5[%c0_8, %c0_9] : memref<8x1xi32, #tpu.memory_space<vmem>>, vector<8x1xi32>
    %c128_i32 = arith.constant 128 : i32
    %14 = arith.muli %arg1, %c128_i32 : i32
    %15 = vector.broadcast %14 : i32 to vector<8x1xi32>
    %16 = arith.subi %13, %15 : vector<8x1xi32>
    %17 = vector.broadcast %16 : vector<8x1xi32> to vector<8x128xi32>
    %18 = arith.cmpi eq, %12, %17 : vector<8x128xi32>
    %c0_10 = arith.constant 0 : index
    %c0_11 = arith.constant 0 : index
    %19 = vector.load %arg8[%c0_10, %c0_11] : memref<8x1xf32, #tpu.memory_space<vmem>>, vector<8x1xf32>
    %cst_12 = arith.constant 0.000000e+00 : f32
    %20 = vector.broadcast %cst_12 : f32 to vector<8x128xf32>
    %21 = arith.select %18, %11, %20 : vector<8x128xi1>, vector<8x128xf32>
    %cst_13 = arith.constant dense<0.000000e+00> : vector<8xf32>
    %22 = vector.multi_reduction <add>, %21, %cst_13 [1] : vector<8x128xf32> to vector<8xf32>
    %23 = vector.shape_cast %22 : vector<8xf32> to vector<8x1xf32>
    %24 = arith.addf %19, %23 : vector<8x1xf32>
    %c0_14 = arith.constant 0 : index
    %c0_15 = arith.constant 0 : index
    %25 = vector.load %arg8[%c0_14, %c0_15] : memref<8x1xf32, #tpu.memory_space<vmem>>, vector<8x1xf32>
    tpu.vector_store %arg8[%c0_14, %c0_15], %24 {strides = array<i32>} : memref<8x1xf32, #tpu.memory_space<vmem>>, vector<8x1xf32>,
    %c128_i32_16 = arith.constant 128 : i32
    %26 = arith.muli %arg1, %c128_i32_16 : i32
    %c250_i32 = arith.constant 250 : i32
    %27 = arith.subi %c250_i32, %26 : i32
    %28 = vector.broadcast %27 : i32 to vector<8x128xi32>
    %29 = arith.cmpi sge, %12, %28 : vector<8x128xi32>
    %30 = arith.ori %18, %29 : vector<8x128xi1>
    %cst_17 = arith.constant -9.000000e+03 : f32
    %31 = vector.broadcast %cst_17 : f32 to vector<8x128xf32>
    %32 = arith.select %30, %31, %11 : vector<8x128xi1>, vector<8x128xf32>
    %c0_18 = arith.constant 0 : index
    %c0_19 = arith.constant 0 : index
    %33 = vector.load %arg9[%c0_18, %c0_19] : memref<8x1xf32, #tpu.memory_space<vmem>>, vector<8x1xf32>
    %34 = math.exp %32 : vector<8x128xf32>
    %cst_20 = arith.constant dense<0.000000e+00> : vector<8xf32>
    %35 = vector.multi_reduction <add>, %34, %cst_20 [1] : vector<8x128xf32> to vector<8xf32>
    %36 = vector.shape_cast %35 : vector<8xf32> to vector<8x1xf32>
    %37 = arith.addf %33, %36 : vector<8x1xf32>
    %c0_21 = arith.constant 0 : index
    %c0_22 = arith.constant 0 : index
    %38 = vector.load %arg9[%c0_21, %c0_22] : memref<8x1xf32, #tpu.memory_space<vmem>>, vector<8x1xf32>
    tpu.vector_store %arg9[%c0_21, %c0_22], %37 {strides = array<i32>} : memref<8x1xf32, #tpu.memory_space<vmem>>, vector<8x1xf32>,
    %c1_i32 = arith.constant 1 : i32
    %39 = arith.cmpi eq, %arg1, %c1_i32 : i32
    %40 = arith.extui %39 : i1 to i32
    %c0_i32_23 = arith.constant 0 : i32
    %41 = arith.cmpi ne, %40, %c0_i32_23 : i32
    scf.if %41 {
      %c0_24 = arith.constant 0 : index
      %c0_25 = arith.constant 0 : index
      %42 = vector.load %arg8[%c0_24, %c0_25] : memref<8x1xf32, #tpu.memory_space<vmem>>, vector<8x1xf32>
      %cst_26 = arith.constant 1.200000e+01 : f32
      %43 = vector.broadcast %cst_26 : f32 to vector<8x1xf32>
      %44 = arith.subf %42, %43 : vector<8x1xf32>
      %45 = math.exp %44 : vector<8x1xf32>
      %c0_27 = arith.constant 0 : index
      %c0_28 = arith.constant 0 : index
      %46 = vector.load %arg9[%c0_27, %c0_28] : memref<8x1xf32, #tpu.memory_space<vmem>>, vector<8x1xf32>
      %47 = arith.addf %45, %46 : vector<8x1xf32>
      %cst_29 = arith.constant 1.000000e-07 : f32
      %48 = vector.broadcast %cst_29 : f32 to vector<8x1xf32>
      %49 = arith.addf %47, %48 : vector<8x1xf32>
      %50 = math.log %49 : vector<8x1xf32>
      %51 = arith.subf %44, %50 : vector<8x1xf32>
      %c0_30 = arith.constant 0 : index
      %c0_31 = arith.constant 0 : index
      %52 = vector.load %arg6[%c0_30, %c0_31] : memref<8x1xf32, #tpu.memory_space<vmem>>, vector<8x1xf32>
      tpu.vector_store %arg6[%c0_30, %c0_31], %51 {strides = array<i32>} : memref<8x1xf32, #tpu.memory_space<vmem>>, vector<8x1xf32>,
    } else {
    }
    return
  }
  func.func @transform_0(%arg0: i32, %arg1: i32) -> (i32, i32) {
    %c0_i32 = arith.constant 0 : i32
    %c0_i32_0 = arith.constant 0 : i32
    return %arg0, %c0_i32 : i32, i32
  }
  func.func @transform_1(%arg0: i32, %arg1: i32) -> (i32, i32) {
    %c0_i32 = arith.constant 0 : i32
    %c0_i32_0 = arith.constant 0 : i32
    return %c0_i32, %arg1 : i32, i32
  }
  func.func @transform_2(%arg0: i32, %arg1: i32) -> (i32, i32) {
    %c0_i32 = arith.constant 0 : i32
    %c0_i32_0 = arith.constant 0 : i32
    return %c0_i32, %arg1 : i32, i32
  }
  func.func @transform_3(%arg0: i32, %arg1: i32) -> (i32, i32) {
    %c0_i32 = arith.constant 0 : i32
    %c0_i32_0 = arith.constant 0 : i32
    return %arg0, %c0_i32 : i32, i32
  }
  func.func @transform_4(%arg0: i32, %arg1: i32) -> (i32, i32) {
    %c0_i32 = arith.constant 0 : i32
    %c0_i32_0 = arith.constant 0 : i32
    return %arg0, %c0_i32 : i32, i32
  }
}

</mosaic_0001>

<llo_original>
// kernel: tpu_custom_call.1
$region0: #{tpu_custom_call.1}
  #allocation0 [shape = 'u32[]', space=smem, size = 0x4, offset = 0x4, fixed_abs, tag = 'smem constant byte address 0x4 - core index']
  #allocation1 [shape = 'u32[144,128]{1,0:T(1,128)}', space=vmem, size = 0x12000, scoped, tag = 'internal scratch']
  #allocation2 [shape = 'f32[8,1]{1,0:T(8,128)}', space=vmem, size = 0x1000, scoped, tag = 'scratch operand']
  #allocation3 [shape = 'f32[8,1]{1,0:T(8,128)}', space=vmem, size = 0x1000, scoped, tag = 'scratch operand']
  #allocation4 [shape = 'f32[8,1]{1,0:T(8,128)}', space=vmem, size = 0x1000, scoped, tag = 'scratch operand']
  %s0 = inlined_call_operand.vmem [shape: f32[16,128], index: 0, kind: input, shape index: {}]
  %s1 = inlined_call_operand.hbm [shape: f32[128,256], index: 1, kind: input, shape index: {}]
  %s2 = inlined_call_operand.vmem [shape: f32[1,256], index: 2, kind: input, shape index: {}]
  %s3 = inlined_call_operand.vmem [shape: s32[16,1], index: 3, kind: input, shape index: {}]
  %s4 = inlined_call_operand.vmem [shape: f32[16,1], index: 4, kind: output, shape index: {}]
  %s5 = sld [smem:[#allocation0]]
  $region61: #{tpu_custom_call.1} parent=0
    _
  %s7 = ssub.s32 1, %s5
  %s8 = scalar_select 0, %s7, %s5
  $region1: #{tpu_custom_call.1} parent=0
    #allocation5 [shape = 'u8[131072]{0}', space=vmem, size = 0x20000, scoped, tag = 'input window, operand 1']
    #allocation6 [shape = 's32[2]{0}', space=sflag, size = 0x8, scoped, tag = 'scoped memory for tpu_custom_call.1']
    %9 = vsyncpa [#allocation6], 0
    %s10 = scalar_lea.sflag [#allocation6], 1
    %11 = vsyncpa %s10, 0
    loop: start=0, step=1, limit=6
    $region2: #{tpu_custom_call.1} parent=1 // loop_pre_header
      _
    $region3: #{tpu_custom_call.1} parent=1 // loop_header
      %s13 = sphi 0, %s17
      %p14 = scmp.ge.s32.totalorder %s13, 6
      %s20 = sphi 0, %s32
      %s21 = sphi 0, %s28
      %s22 = sphi 0, %s20
      %s23 = sphi 0, %s21
      %s24 = sphi 0, %s22
      %s25 = sphi 0, %s23
      %s35 = sphi 0, %s37
      %s38 = sphi 0, %s35
      %s39 = sphi 0, %s38
      %s55 = sphi 0, %s39
      %s61 = sphi 0, %s63
      %s64 = sphi 0, %s61
      %s65 = sphi 0, %s64
      %s81 = sphi 0, %s65
      %s87 = sphi 0, %s89
      %s90 = sphi 0, %s87
      %s91 = sphi 0, %s90
      %s107 = sphi 0, %s91
      %s113 = sphi 0, %s115
      %s116 = sphi 0, %s113
      %s117 = sphi 0, %s116
      %s133 = sphi 0, %s117
      %s139 = sphi 0, %s141
      %s142 = sphi 0, %s139
      %s143 = sphi 0, %s142
      %s159 = sphi 0, %s143
    $region4: #{tpu_custom_call.1} parent=1 // loop_header_branch
      %16 = sbr.rel (%p14) target = $region8
    $region5: #{tpu_custom_call.1} parent=1 // loop_body
      %s18 = ssub.s32 %s13, 1
      %s19 = ssub.s32 %s13, 2
      %s26 = sadd.s32 1, %s21
      %p27 = scmp.ge.s32.totalorder %s26, 2
      %s28 = scalar_select %p27, 0, %s26
      %s29 = sadd.s32 1, %s20
      %s30 = scalar_select %p27, %s29, %s20
      %p31 = scmp.ge.s32.totalorder %s30, 2
      %s32 = scalar_select %p31, 0, %s30
      %s33 = ssub.s32 %s20, %s32
      %p34 = scmp.eq.s32.totalorder %s33, 0
      %s36 = sadd.s32 %s35, 1
      %s37 = scalar_select %p34, %s35, %s36
      %p40 = pneg %p34
      %p41 = scmp.eq.s32.totalorder %s13, 3
      %p42 = por %p40, %p41
      %p43 = scmp.ne.s32.totalorder %s35, %s38
      %p44 = scmp.eq.s32.totalorder %s13, 0
      %p45 = por %p43, %p44
      %p46 = scmp.ne.s32.totalorder %s35, %s38
      %p47 = scmp.eq.s32.totalorder %s18, 3
      %p48 = por %p46, %p47
      %p49 = scmp.ne.s32.totalorder %s38, %s39
      %p50 = scmp.eq.s32.totalorder %s18, 0
      %p51 = por %p49, %p50
      %p52 = scmp.ne.s32.totalorder %s38, %s39
      %p53 = scmp.eq.s32.totalorder %s19, 3
      %p54 = por %p52, %p53
      %p56 = scmp.ne.s32.totalorder %s39, %s55
      %p57 = scmp.eq.s32.totalorder %s19, 0
      %p58 = por %p56, %p57
      %s59 = ssub.s32 %s21, %s28
      %p60 = scmp.eq.s32.totalorder %s59, 0
      %s62 = sadd.s32 %s61, 1
      %s63 = scalar_select %p60, %s61, %s62
      %p66 = pneg %p60
      %p67 = scmp.eq.s32.totalorder %s13, 3
      %p68 = por %p66, %p67
      %p69 = scmp.ne.s32.totalorder %s61, %s64
      %p70 = scmp.eq.s32.totalorder %s13, 0
      %p71 = por %p69, %p70
      %p72 = scmp.ne.s32.totalorder %s61, %s64
      %p73 = scmp.eq.s32.totalorder %s18, 3
      %p74 = por %p72, %p73
      %p75 = scmp.ne.s32.totalorder %s64, %s65
      %p76 = scmp.eq.s32.totalorder %s18, 0
      %p77 = por %p75, %p76
      %p78 = scmp.ne.s32.totalorder %s64, %s65
      %p79 = scmp.eq.s32.totalorder %s19, 3
      %p80 = por %p78, %p79
      %p82 = scmp.ne.s32.totalorder %s65, %s81
      %p83 = scmp.eq.s32.totalorder %s19, 0
      %p84 = por %p82, %p83
      %s85 = ssub.s32 %s21, %s28
      %p86 = scmp.eq.s32.totalorder %s85, 0
      %s88 = sadd.s32 %s87, 1
      %s89 = scalar_select %p86, %s87, %s88
      %p92 = pneg %p86
      %p93 = scmp.eq.s32.totalorder %s13, 3
      %p94 = por %p92, %p93
      %p95 = scmp.ne.s32.totalorder %s87, %s90
      %p96 = scmp.eq.s32.totalorder %s13, 0
      %p97 = por %p95, %p96
      %p98 = scmp.ne.s32.totalorder %s87, %s90
      %p99 = scmp.eq.s32.totalorder %s18, 3
      %p100 = por %p98, %p99
      %p101 = scmp.ne.s32.totalorder %s90, %s91
      %p102 = scmp.eq.s32.totalorder %s18, 0
      %p103 = por %p101, %p102
      %p104 = scmp.ne.s32.totalorder %s90, %s91
      %p105 = scmp.eq.s32.totalorder %s19, 3
      %p106 = por %p104, %p105
      %p108 = scmp.ne.s32.totalorder %s91, %s107
      %p109 = scmp.eq.s32.totalorder %s19, 0
      %p110 = por %p108, %p109
      %s111 = ssub.s32 %s20, %s32
      %p112 = scmp.eq.s32.totalorder %s111, 0
      %s114 = sadd.s32 %s113, 1
      %s115 = scalar_select %p112, %s113, %s114
      %p118 = pneg %p112
      %p119 = scmp.eq.s32.totalorder %s13, 3
      %p120 = por %p118, %p119
      %p121 = scmp.ne.s32.totalorder %s113, %s116
      %p122 = scmp.eq.s32.totalorder %s13, 0
      %p123 = por %p121, %p122
      %p124 = scmp.ne.s32.totalorder %s113, %s116
      %p125 = scmp.eq.s32.totalorder %s18, 3
      %p126 = por %p124, %p125
      %p127 = scmp.ne.s32.totalorder %s116, %s117
      %p128 = scmp.eq.s32.totalorder %s18, 0
      %p129 = por %p127, %p128
      %p130 = scmp.ne.s32.totalorder %s116, %s117
      %p131 = scmp.eq.s32.totalorder %s19, 3
      %p132 = por %p130, %p131
      %p134 = scmp.ne.s32.totalorder %s117, %s133
      %p135 = scmp.eq.s32.totalorder %s19, 0
      %p136 = por %p134, %p135
      %s137 = ssub.s32 %s20, %s32
      %p138 = scmp.eq.s32.totalorder %s137, 0
      %s140 = sadd.s32 %s139, 1
      %s141 = scalar_select %p138, %s139, %s140
      %p144 = pneg %p138
      %p145 = scmp.eq.s32.totalorder %s13, 3
      %p146 = por %p144, %p145
      %p147 = scmp.ne.s32.totalorder %s139, %s142
      %p148 = scmp.eq.s32.totalorder %s13, 0
      %p149 = por %p147, %p148
      %p150 = scmp.ne.s32.totalorder %s139, %s142
      %p151 = scmp.eq.s32.totalorder %s18, 3
      %p152 = por %p150, %p151
      %p153 = scmp.ne.s32.totalorder %s142, %s143
      %p154 = scmp.eq.s32.totalorder %s18, 0
      %p155 = por %p153, %p154
      %p156 = scmp.ne.s32.totalorder %s142, %s143
      %p157 = scmp.eq.s32.totalorder %s19, 3
      %p158 = por %p156, %p157
      %p160 = scmp.ne.s32.totalorder %s143, %s159
      %p161 = scmp.eq.s32.totalorder %s19, 0
      %p162 = por %p160, %p161
      %p163 = scmp.le.s32.totalorder 1, %s13
      %p164 = scmp.lt.s32.totalorder %s13, 5
      %p165 = pnand %p163, %p164
      %p166 = pneg %p165
      // Predicated region
      $region9: #{tpu_custom_call.1} parent=5 // pred_check
        _
      $region10: #{tpu_custom_call.1} parent=5 // pred_check_branch
        %168 = sbr.rel (%p165) target = $region12
      $region11: #{tpu_custom_call.1} parent=5 // pred_region
        %s169 = ssub.s32 %s13, 1
      $region12: #{tpu_custom_call.1} parent=5 // pred_fallthru
        _
      %p170 = scmp.lt.s32.totalorder %s13, 4
      // Predicated region
      $region13: #{tpu_custom_call.1} parent=5 // pred_check
        %p171 = pneg %p170
      $region14: #{tpu_custom_call.1} parent=5 // pred_check_branch
        %173 = sbr.rel (%p171) target = $region16
      $region15: #{tpu_custom_call.1} parent=5 // pred_region
        // Predicated region
        $region17: #{tpu_custom_call.1} parent=15 // pred_check
          %p174 = pneg %p45
        $region18: #{tpu_custom_call.1} parent=15 // pred_check_branch
          %176 = sbr.rel (%p174) target = $region20
        $region19: #{tpu_custom_call.1} parent=15 // pred_region
          %p177 = scmp.lt.s32.totalorder %s20, 1
          %s178 = scalar_select %p177, %s20, 1
          %s179 = smul.addr %s178, 8
          %s180 = scalar_lea.vmem %s0, %s179
        $region20: #{tpu_custom_call.1} parent=15 // pred_fallthru
          _
        // Predicated region
        $region21: #{tpu_custom_call.1} parent=15 // pred_check
          %p181 = pneg %p71
        $region22: #{tpu_custom_call.1} parent=15 // pred_check_branch
          %183 = sbr.rel (%p181) target = $region24
        $region23: #{tpu_custom_call.1} parent=15 // pred_region
          %s184 = sand.u32 %s61, 1
          %s185 = scalar_lea.sflag [#allocation6], %s184
          %s186 = sand.u32 %s61, 1
          %s187 = smul.addr %s186, 128
          %s188 = scalar_lea.vmem [#allocation5], %s187
          %s190 = ssub.s32 2048, 2048
          %191 = vsyncadd %s185, %s190
          %s192 = smul.addr %s21, 128
          %s193 = scalar_lea.hbm %s1, %s192
          %s194 = sshll.u32 %s188, 4
          %s195 = int_to_ptr.vmem [resolvable:$true] %s194
          %200 = dma.hbm_to_vmem [thread:$0]  %s193, 2048, %s195, %s185, 256, 128, 8
        $region24: #{tpu_custom_call.1} parent=15 // pred_fallthru
          _
        // Predicated region
        $region25: #{tpu_custom_call.1} parent=15 // pred_check
          %p201 = pneg %p97
        $region26: #{tpu_custom_call.1} parent=15 // pred_check_branch
          %203 = sbr.rel (%p201) target = $region28
        $region27: #{tpu_custom_call.1} parent=15 // pred_region
          %p204 = scmp.lt.s32.totalorder %s21, 1
          %s205 = scalar_select %p204, %s21, 1
          %s206 = scalar_lea.vmem %s2, %s205
        $region28: #{tpu_custom_call.1} parent=15 // pred_fallthru
          _
        // Predicated region
        $region29: #{tpu_custom_call.1} parent=15 // pred_check
          %p207 = pneg %p123
        $region30: #{tpu_custom_call.1} parent=15 // pred_check_branch
          %209 = sbr.rel (%p207) target = $region32
        $region31: #{tpu_custom_call.1} parent=15 // pred_region
          %p210 = scmp.lt.s32.totalorder %s20, 1
          %s211 = scalar_select %p210, %s20, 1
          %s212 = smul.addr %s211, 8
          %s213 = scalar_lea.vmem %s3, %s212
        $region32: #{tpu_custom_call.1} parent=15 // pred_fallthru
          _
      $region16: #{tpu_custom_call.1} parent=5 // pred_fallthru
        _
      %p214 = scmp.le.s32.totalorder 1, %s13
      %p215 = scmp.lt.s32.totalorder %s13, 5
      %p216 = pnand %p214, %p215
      %p217 = pneg %p216
      // Predicated region
      $region33: #{tpu_custom_call.1} parent=5 // pred_check
        _
      $region34: #{tpu_custom_call.1} parent=5 // pred_check_branch
        %219 = sbr.rel (%p216) target = $region36
      $region35: #{tpu_custom_call.1} parent=5 // pred_region
        %s220 = ssub.s32 %s13, 1
        %s221 = sand.u32 %s64, 1
        %s222 = scalar_lea.sflag [#allocation6], %s221
        %s223 = sand.u32 %s64, 1
        %s224 = smul.addr %s223, 128
        %s225 = scalar_lea.vmem [#allocation5], %s224
        // Predicated region
        $region37: #{tpu_custom_call.1} parent=35 // pred_check
          %p226 = pneg %p77
        $region38: #{tpu_custom_call.1} parent=35 // pred_check_branch
          %228 = sbr.rel (%p226) target = $region40
        $region39: #{tpu_custom_call.1} parent=35 // pred_region
          %229 = dma.done %s222, 2048
        $region40: #{tpu_custom_call.1} parent=35 // pred_fallthru
          _
        %p230 = scmp.lt.s32.totalorder %s22, 1
        %s231 = scalar_select %p230, %s22, 1
        %s232 = smul.addr %s231, 8
        %s233 = scalar_lea.vmem %s0, %s232
        %p234 = pneg %p51
        %p235 = pneg %p48
        %s236 = sand.u32 %s64, 1
        %s237 = scalar_lea.sflag [#allocation6], %s236
        %s238 = sand.u32 %s64, 1
        %s239 = smul.addr %s238, 128
        %s240 = scalar_lea.vmem [#allocation5], %s239
        %p241 = pneg %p77
        %p242 = pneg %p74
        %p243 = scmp.lt.s32.totalorder %s23, 1
        %s244 = scalar_select %p243, %s23, 1
        %s245 = scalar_lea.vmem %s2, %s244
        %p246 = pneg %p103
        %p247 = pneg %p100
        %p248 = scmp.lt.s32.totalorder %s22, 1
        %s249 = scalar_select %p248, %s22, 1
        %s250 = smul.addr %s249, 8
        %s251 = scalar_lea.vmem %s3, %s250
        %p252 = pneg %p129
        %p253 = pneg %p126
        %p254 = pneg %p155
        %p255 = pneg %p152
        %p256 = scmp.lt.s32.totalorder %s22, 1
        %s257 = scalar_select %p256, %s22, 1
        %s258 = smul.addr %s257, 8
        %s259 = scalar_lea.vmem %s4, %s258
        %p260 = scmp.lt.s32.totalorder %s22, 1
        %s261 = scalar_select %p260, %s22, 1
        %s262 = smul.addr %s261, 8
        %s263 = scalar_lea.vmem %s0, %s262
        %p264 = scmp.lt.s32.totalorder %s23, 1
        %s265 = scalar_select %p264, %s23, 1
        %s266 = scalar_lea.vmem %s2, %s265
        %p267 = scmp.lt.s32.totalorder %s22, 1
        %s268 = scalar_select %p267, %s22, 1
        %s269 = smul.addr %s268, 8
        %s270 = scalar_lea.vmem %s3, %s269
        %p271 = scmp.lt.s32.totalorder %s22, 1
        %s272 = scalar_select %p271, %s22, 1
        %s273 = smul.addr %s272, 8
        %s274 = scalar_lea.vmem %s4, %s273
        %p275 = scmp.eq.s32.totalorder %s23, 0
        // Predicated region
        $region41: #{tpu_custom_call.1} parent=35 // pred_check
          %p276 = pneg %p275
        $region42: #{tpu_custom_call.1} parent=35 // pred_check_branch
          %278 = sbr.rel (%p276) target = $region44
        $region43: #{tpu_custom_call.1} parent=35 // pred_region
          %v279 = vld [vmem:[%s263] sm:$0xff]
          %v280 = vmul.f32 %v279, %v279
          %281 = vadd.xlane.f32.xlu0 %v280
          %v282 = vpop.xlane.xlu0 %281
          %v283 = vmax.f32 %v282, 1e-24
          %v284 = vrsqrt.pop %v283
          %v285 = vmul.f32 %v284, 30.0
          %vm286 = vcmask 7168
          %287 = vst.msk [vmem:[#allocation2] sm:$0xff] %vm286, %v285
          %288 = vst.msk [vmem:[#allocation3] sm:$0xff] %vm286, 0.0
          %289 = vst.msk [vmem:[#allocation4] sm:$0xff] %vm286, 0.0
        $region44: #{tpu_custom_call.1} parent=35 // pred_fallthru
          _
        %v290 = vld [vmem:[%s263] sm:$0xff]
        %v291 = vld [vmem:[%s225] sm:$0xff]
        %v292 = vld [vmem:[%s225 + $0x8] sm:$0xff]
        %v293 = vld [vmem:[%s225 + $0x10] sm:$0xff]
        %v294 = vld [vmem:[%s225 + $0x18] sm:$0xff]
        %v295 = vld [vmem:[%s225 + $0x20] sm:$0xff]
        %v296 = vld [vmem:[%s225 + $0x28] sm:$0xff]
        %v297 = vld [vmem:[%s225 + $0x30] sm:$0xff]
        %v298 = vld [vmem:[%s225 + $0x38] sm:$0xff]
        %v299 = vld [vmem:[%s225 + $0x40] sm:$0xff]
        %v300 = vld [vmem:[%s225 + $0x48] sm:$0xff]
        %v301 = vld [vmem:[%s225 + $0x50] sm:$0xff]
        %v302 = vld [vmem:[%s225 + $0x58] sm:$0xff]
        %v303 = vld [vmem:[%s225 + $0x60] sm:$0xff]
        %v304 = vld [vmem:[%s225 + $0x68] sm:$0xff]
        %v305 = vld [vmem:[%s225 + $0x70] sm:$0xff]
        %v306 = vld [vmem:[%s225 + $0x78] sm:$0xff]
        %307 = vmatprep.subr.mxu0 0.0
        %308 = vmatpush1.msra.mxu0 %v291
        %309 = vmatprep.subr.mxu0 0.0
        %310 = vmatpush1.msra.mxu0 %v292
        %311 = vmatprep.subr.mxu0 0.0
        %312 = vmatpush1.msra.mxu0 %v293
        %313 = vmatprep.subr.mxu0 0.0
        %314 = vmatpush1.msra.mxu0 %v294
        %315 = vmatprep.subr.mxu0 0.0
        %316 = vmatpush1.msra.mxu0 %v295
        %317 = vmatprep.subr.mxu0 0.0
        %318 = vmatpush1.msra.mxu0 %v296
        %319 = vmatprep.subr.mxu0 0.0
        %320 = vmatpush1.msra.mxu0 %v297
        %321 = vmatprep.subr.mxu0 0.0
        %322 = vmatpush1.msra.mxu0 %v298
        %323 = vmatprep.subr.mxu0 0.0
        %324 = vmatpush1.msra.mxu0 %v299
        %325 = vmatprep.subr.mxu0 0.0
        %326 = vmatpush1.msra.mxu0 %v300
        %327 = vmatprep.subr.mxu0 0.0
        %328 = vmatpush1.msra.mxu0 %v301
        %329 = vmatprep.subr.mxu0 0.0
        %330 = vmatpush1.msra.mxu0 %v302
        %331 = vmatprep.subr.mxu0 0.0
        %332 = vmatpush1.msra.mxu0 %v303
        %333 = vmatprep.subr.mxu0 0.0
        %334 = vmatpush1.msra.mxu0 %v304
        %335 = vmatprep.subr.mxu0 0.0
        %336 = vmatpush1.msra.mxu0 %v305
        %337 = vmatprep.subr.mxu0 0.0
        %338 = vmatpush1.msra.mxu0 %v306
        %339 = vmatprep.subr.mxu0 0.0
        %340 = vmatpush1.msra.mxu0 0.0
        %341 = vmatprep.subr.mxu0 0.0
        %342 = vmatpush1.msra.mxu0 0.0
        %343 = vmatprep.subr.mxu0 0.0
        %344 = vmatpush1.msra.mxu0 0.0
        %345 = vmatprep.subr.mxu0 0.0
        %346 = vmatpush1.msra.mxu0 0.0
        %347 = vmatprep.subr.mxu0 0.0
        %348 = vmatpush1.msra.mxu0 0.0
        %349 = vmatprep.subr.mxu0 0.0
        %350 = vmatpush1.msra.mxu0 0.0
        %351 = vmatprep.subr.mxu0 0.0
        %352 = vmatpush1.msra.mxu0 0.0
        %353 = vmatprep.subr.mxu0 0.0
        %354 = vmatpush1.msra.mxu0 0.0
        %355 = vmatprep.subr.mxu0 0.0
        %356 = vmatpush1.msra.mxu0 0.0
        %357 = vmatprep.subr.mxu0 0.0
        %358 = vmatpush1.msra.mxu0 0.0
        %359 = vmatprep.subr.mxu0 0.0
        %360 = vmatpush1.msra.mxu0 0.0
        %361 = vmatprep.subr.mxu0 0.0
        %362 = vmatpush1.msra.mxu0 0.0
        %363 = vmatprep.subr.mxu0 0.0
        %364 = vmatpush1.msra.mxu0 0.0
        %365 = vmatprep.subr.mxu0 0.0
        %366 = vmatpush1.msra.mxu0 0.0
        %367 = vmatprep.subr.mxu0 0.0
        %368 = vmatpush1.msra.mxu0 0.0
        %369 = vmatprep.subr.mxu0 0.0
        %370 = vmatpush1.msra.mxu0 0.0
        %371 = vmatprep.mubr.f32.mxu0 0.0
        %372 = vmatmul.mubr.f32.gmra.mrb[0].mxu0 %v290
        %v373 = vpop.f32.mrb[0].mxu0
        %v374 = vadd.f32 0.0, %v373
        %v375 = vpop.f32.mrb[0].mxu0
        %376 = vdwg.mxu0
        %v377 = vld [vmem:[#allocation2] sm:$0xff]
        %379 = vset.pattern.permute.xlu0 0
        %380 = vperm.xlu0 %379, %v377
        %v381 = vpop.permute.xlu0 %380
        %v383 = vmul.f32 %v374, %v381
        %v384 = vld [vmem:[%s266] sm:$0x1]
        %v386 = vlaneseq
        %v387 = vshrl.u32 %v386, 7
        %v388 = vsub.s32 0, %v387
        %v389 = vrot.slane %v384, %v388
        %v391 = vmul.f32 %v383, %v389
        %v392 = vlaneseq
        %v393 = vand.u32 %v392, 127
        %v394 = vld [vmem:[%s270] sm:$0xff]
        %s395 = smul.u32 %s23, 128
        %v396 = vstv %s395
        %v397 = vsub.s32 %v394, %v396
        %398 = vset.pattern.permute.xlu0 0
        %399 = vperm.xlu0 %398, %v397
        %v400 = vpop.permute.xlu0 %399
        %vm401 = vcmp.eq.s32.totalorder %v393, %v400
        %v402 = vld [vmem:[#allocation3] sm:$0xff]
        %v403 = vsel %vm401, %v391, 0.0
        %404 = vadd.xlane.f32.xlu0 %v403
        %v405 = vpop.xlane.xlu0 %404
        %v406 = vadd.f32 %v402, %v405
        %vm407 = vcmask 7168
        %408 = vst.msk [vmem:[#allocation3] sm:$0xff] %vm407, %v406
        %s409 = ssub.s32 250, %s395
        %v410 = vstv %s409
        %vm411 = vcmp.ge.s32.totalorder %v393, %v410
        %vm412 = vmor %vm401, %vm411
        %v413 = vsel %vm412, -9000.0, %v391
        %v414 = vld [vmem:[#allocation4] sm:$0xff]
        %v415 = vmul.f32 %v413, 1.442695
        %v416 = vpow.pop %v415
        %417 = vadd.xlane.f32.xlu0 %v416
        %v418 = vpop.xlane.xlu0 %417
        %v419 = vadd.f32 %v414, %v418
        %420 = vst.msk [vmem:[#allocation4] sm:$0xff] %vm407, %v419
        %p421 = scmp.eq.s32.totalorder %s23, 1
        // Predicated region
        $region45: #{tpu_custom_call.1} parent=35 // pred_check
          %p422 = pneg %p421
        $region46: #{tpu_custom_call.1} parent=35 // pred_check_branch
          %424 = sbr.rel (%p422) target = $region48
        $region47: #{tpu_custom_call.1} parent=35 // pred_region
          %v425 = vld [vmem:[#allocation3] sm:$0xff]
          %v426 = vsub.f32 %v425, 12.0
          %v427 = vmul.f32 %v426, 1.442695
          %v428 = vpow.pop %v427
          %v429 = vld [vmem:[#allocation4] sm:$0xff]
          %v430 = vadd.f32 %v428, %v429
          %v431 = vadd.f32 %v430, 1e-07
          %v432 = vlog2.pop %v431
          %v433 = vmul.f32 %v432, 0.6931472
          %v434 = vsub.f32 %v426, %v433
          %435 = vst.msk [vmem:[%s274] sm:$0xff] %vm407, %v434
        $region48: #{tpu_custom_call.1} parent=35 // pred_fallthru
          _
        %p436 = scmp.lt.s32.totalorder %s22, 1
        %s437 = scalar_select %p436, %s22, 1
        %s438 = smul.addr %s437, 8
        %s439 = scalar_lea.vmem %s4, %s438
        // Predicated region
        $region49: #{tpu_custom_call.1} parent=35 // pred_check
          %p440 = pneg %p152
        $region50: #{tpu_custom_call.1} parent=35 // pred_check_branch
          %442 = sbr.rel (%p440) target = $region52
        $region51: #{tpu_custom_call.1} parent=35 // pred_region
          _
        $region52: #{tpu_custom_call.1} parent=35 // pred_fallthru
          _
      $region36: #{tpu_custom_call.1} parent=5 // pred_fallthru
        _
      %p443 = scmp.le.s32.totalorder 2, %s13
      // Predicated region
      $region53: #{tpu_custom_call.1} parent=5 // pred_check
        %p444 = pneg %p443
      $region54: #{tpu_custom_call.1} parent=5 // pred_check_branch
        %446 = sbr.rel (%p444) target = $region56
      $region55: #{tpu_custom_call.1} parent=5 // pred_region
        %s447 = ssub.s32 %s13, 2
        // Predicated region
        $region57: #{tpu_custom_call.1} parent=55 // pred_check
          %p448 = pneg %p158
        $region58: #{tpu_custom_call.1} parent=55 // pred_check_branch
          %450 = sbr.rel (%p448) target = $region60
        $region59: #{tpu_custom_call.1} parent=55 // pred_region
          %p451 = scmp.lt.s32.totalorder %s24, 1
          %s452 = scalar_select %p451, %s24, 1
          %s453 = smul.addr %s452, 8
          %s454 = scalar_lea.vmem %s4, %s453
        $region60: #{tpu_custom_call.1} parent=55 // pred_fallthru
          _
      $region56: #{tpu_custom_call.1} parent=5 // pred_fallthru
        _
    $region6: #{tpu_custom_call.1} parent=1 // loop_footer
      %s17 = sadd.s32 1, %s13
    $region7: #{tpu_custom_call.1} parent=1 // loop_footer_branch
      %12 = sbr.rel target = $region3
    $region8: #{tpu_custom_call.1} parent=1 // loop_exit
      _
    %455 = vsyncpa [#allocation6], 1
    %s456 = scalar_lea.sflag [#allocation6], 1
    %457 = vsyncpa %s456, 1

</llo_original>
